<compile_context>
chip_gen: v7x
topology: tpu7x:2x2x1
jax: 0.10.0
libtpu: 0.0.40
codegen_flags: <defaults>
</compile_context>

<pallas_src>
import functools
import math

import jax
import jax.numpy as jnp
from jax import lax
from jax.experimental import pallas as pl
from jax.experimental.pallas import tpu as pltpu


def _heatmap_kernel(pts_ref, out_ref, *, radius, n_total):
    """Fill one (block_n, th, W) output block.

    pts_ref: SMEM int32 (2*N,) -- interleaved [cx0, cy0, cx1, cy1, ...],
             already rounded and clamped to image bounds.
    out_ref: VMEM (block_n, th, W) output tile (batch-block i, row-block j).
    """
    block_n, h_blk, w = out_ref.shape
    base = pl.program_id(0) * block_n          # first batch item of this block
    row0 = pl.program_id(1) * h_blk            # first image row of this block

    # Compile-time constants; no per-pixel divides.
    inv_2r2 = -1.0 / (2.0 * float(radius) * float(radius))
    kmin = math.exp(-1.0)                      # kernel.min() == exp(-2r^2/(2r^2))
    scale = 1.0 / (1.0 - kmin)                 # 1 / (kernel.max() - kernel.min())
    off = kmin * scale

    # Hoisted index vectors (JAX does not CSE broadcast_in_dim; build once).
    ys = row0 + lax.broadcasted_iota(jnp.int32, (h_blk, 1), 0)   # (h_blk, 1)
    xs = lax.broadcasted_iota(jnp.int32, (1, w), 1)              # (1, w)

    def body(b, carry):
        # Clamp so a ragged last batch block re-computes item n-1 instead of
        # reading past the SMEM points array; its OOB rows are dropped on
        # writeback (out_shape is exactly (N, H, W)).
        item = jnp.minimum(base + b, n_total - 1)
        cx = pts_ref[2 * item]
        cy = pts_ref[2 * item + 1]

        dy = ys - cy                           # (h_blk, 1)
        dx = xs - cx                           # (1, w)
        dyf = dy.astype(jnp.float32)
        dxf = dx.astype(jnp.float32)

        # Separable Gaussian: h_blk + w transcendentals per item, not h*w.
        gy = jnp.exp(dyf * dyf * inv_2r2)                    # (h_blk, 1)
        gx = jnp.exp(dxf * dxf * inv_2r2)                    # (1, w)
        my = (jnp.abs(dy) <= radius).astype(jnp.float32)     # (h_blk, 1)
        mx = (jnp.abs(dx) <= radius).astype(jnp.float32)     # (1, w)

        #   inside ? (gy*gx - kmin) * scale : 0
        # = (gy*my*scale) * (gx*mx) - (my*off) * mx           (fully separable)
        ay = gy * (my * scale)                 # (h_blk, 1)
        by = my * off                          # (h_blk, 1)
        axm = gx * mx                          # (1, w)
        val = ay * axm - by * mx               # (h_blk, w): ~3 VALU ops/pixel
        out_ref[b] = val.astype(out_ref.dtype)
        return carry

    lax.fori_loop(0, block_n, body, 0, unroll=(block_n <= 8))


def _vmem_budget():
    """(per-output-buffer block budget, vmem_limit_bytes), sized per chip gen.

    v5e/v6e have 128 MiB VMEM (16/32 MiB scoped default), v7x has 64 MiB per
    TC; query the capacity and leave headroom for Mosaic internal scratch and
    in-kernel f32 temporaries.
    """
    cap = 64 * 1024 * 1024                     # conservative default (v7x)
    try:
        info = pltpu.get_tpu_info()
        cap = int(getattr(info, "vmem_capacity_bytes", cap) or cap)
    except Exception:
        pass
    vmem_limit = max(32 * 1024 * 1024,
                     min(cap - 16 * 1024 * 1024, 100 * 1024 * 1024))
    block_budget = vmem_limit // 4             # double-buffered output + temps
    return int(block_budget), int(vmem_limit)


def _pick_tiles(n, h, w, itemsize, block_budget):
    """(items per block, rows per block).

    Fill the VMEM budget (amortizes ~0.35us/grid-step overhead for small
    heatmaps), keep >= 2 grid steps when possible (megacore / v7x dual-TC),
    and bound any single block so one huge heatmap can't exceed VMEM.
    """
    sub = max(8, 32 // itemsize)               # sublane tile: 8 f32, 16 bf16
    row_bytes = w * itemsize
    max_rows = max(1, block_budget // row_bytes)
    if h <= max_rows:
        th, nrb = h, 1
    else:                                      # one item exceeds budget: split rows
        th = max(sub, (max_rows // sub) * sub)
        nrb = pl.cdiv(h, th)
    per_item = th * row_bytes
    bt = max(1, min(block_budget // per_item, n))
    if nrb == 1 and n >= 2:
        bt = min(bt, pl.cdiv(n, 2))            # >= 2 batch blocks when rows aren't split
    if n * nrb < 2 and h > sub:                # n == 1: split rows so both v7x TCs work
        th = min(h, ((pl.cdiv(h, 2) + sub - 1) // sub) * sub)
        nrb = pl.cdiv(h, th)
    return int(bt), int(th)


def to_heatmap(points, img, radius=5, block_budget_bytes=None):
    """points: (N, 2) float (cx, cy); img: (N, C, H, W). Returns (N, H, W)."""
    if radius <= 0:
        raise ValueError("ToHeatmap requires radius > 0 (normalization divides by 2*r^2).")
    n, _, h, w = img.shape

    # Glue: round (half-to-even, matching torch.round) + clamp to image bounds.
    cxy = jnp.round(points).astype(jnp.int32)
    cx = jnp.clip(cxy[:, 0], 0, w - 1)
    cy = jnp.clip(cxy[:, 1], 0, h - 1)
    # 1-D interleaved int32 points in SMEM (avoids 2-D SMEM padding blowup).
    pts = jnp.stack([cx, cy], axis=-1).reshape(-1).astype(jnp.int32)   # (2N,)

    itemsize = jnp.dtype(img.dtype).itemsize
    auto_budget, vmem_limit = _vmem_budget()
    block_budget = auto_budget if block_budget_bytes is None else int(block_budget_bytes)
    bt, th = _pick_tiles(n, h, w, itemsize, block_budget)

    kernel_fn = functools.partial(_heatmap_kernel, radius=radius, n_total=n)

    return pl.pallas_call(
        kernel_fn,
        out_shape=jax.ShapeDtypeStruct((n, h, w), img.dtype),
        grid_spec=pltpu.PrefetchScalarGridSpec(
            num_scalar_prefetch=1,             # `pts` lands in SMEM
            grid=(pl.cdiv(n, bt), pl.cdiv(h, th)),
            in_specs=[],
            out_specs=pl.BlockSpec((bt, th, w), lambda i, j, pts_ref: (i, j, 0)),
        ),
        compiler_params=pltpu.CompilerParams(
            dimension_semantics=("parallel", "parallel"),
            vmem_limit_bytes=vmem_limit,
        ),
    )(pts)


def _reference(points, img, radius=5):
    """Pure-JAX reference mirroring the PyTorch loop semantics."""
    n, _, h, w = img.shape
    cxy = jnp.round(points).astype(jnp.int32)
    cx = jnp.clip(cxy[:, 0], 0, w - 1)[:, None, None]
    cy = jnp.clip(cxy[:, 1], 0, h - 1)[:, None, None]
    ys = jnp.arange(h, dtype=jnp.int32)[None, :, None]
    xs = jnp.arange(w, dtype=jnp.int32)[None, None, :]
    dy = ys - cy
    dx = xs - cx
    inside = (jnp.abs(dy) <= radius) & (jnp.abs(dx) <= radius)
    d2 = (dx * dx + dy * dy).astype(jnp.float32)
    g = jnp.exp(-d2 / (2.0 * radius * radius))
    kmin = math.exp(-1.0)
    val = (g - kmin) / (1.0 - kmin)
    return jnp.where(inside, val, 0.0).astype(img.dtype)


if __name__ == "__main__":
    key = jax.random.PRNGKey(0)
    k1, k2, k3, k4, k5, k6, k7, k8 = jax.random.split(key, 8)

    # Test 1: original small shape (W < 128 masked-store path, centers near/out of bounds).
    n, c, h, w = 2, 4, 16, 16
    points = jax.random.uniform(k1, (n, 2), jnp.float32, minval=-2.0, maxval=18.0)
    img = jax.random.normal(k2, (n, c, h, w), jnp.float32)
    out = jax.block_until_ready(to_heatmap(points, img, radius=5))
    ref = _reference(points, img, radius=5)
    assert out.shape == (n, h, w) and out.dtype == img.dtype
    assert jnp.allclose(out, ref, rtol=1e-5, atol=1e-5)

    # Test 2: lane-aligned W, odd batch -> bt=2 with a ragged last batch block
    # (no padded output array, no post-kernel slice).
    n2, c2, h2, w2 = 3, 2, 8, 128
    points2 = jax.random.uniform(k3, (n2, 2), jnp.float32, minval=-4.0, maxval=140.0)
    img2 = jax.random.normal(k4, (n2, c2, h2, w2), jnp.float32)
    out2 = jax.block_until_ready(to_heatmap(points2, img2, radius=3))
    ref2 = _reference(points2, img2, radius=3)
    assert out2.shape == (n2, h2, w2) and out2.dtype == img2.dtype
    assert jnp.allclose(out2, ref2, rtol=1e-5, atol=1e-5)

    # Test 3: single item -> H row-block "parallel" axis kicks in (grid (1, 2)).
    n3, c3, h3, w3 = 1, 3, 16, 128
    points3 = jax.random.uniform(k5, (n3, 2), jnp.float32, minval=0.0, maxval=130.0)
    points3 = points3.at[:, 1].set(points3[:, 1] % 16.0)
    img3 = jax.random.normal(k6, (n3, c3, h3, w3), jnp.float32)
    out3 = jax.block_until_ready(to_heatmap(points3, img3, radius=4))
    ref3 = _reference(points3, img3, radius=4)
    assert jnp.allclose(out3, ref3, rtol=1e-5, atol=1e-5)

    # Test 4: forced tiny VMEM budget -> multi-row-block path at a small shape.
    n4, c4, h4, w4 = 2, 1, 32, 128
    points4 = jax.random.uniform(k7, (n4, 2), jnp.float32, minval=-5.0, maxval=135.0)
    img4 = jax.random.normal(k8, (n4, c4, h4, w4), jnp.float32)
    out4 = jax.block_until_ready(to_heatmap(points4, img4, radius=5, block_budget_bytes=4096))
    ref4 = _reference(points4, img4, radius=5)
    assert jnp.allclose(out4, ref4, rtol=1e-5, atol=1e-5)

    print("KERNEL_OK")
</pallas_src>

<mosaic_0001>
module attributes {stable_mosaic.version = 11 : i64} {
  func.func @_heatmap_kernel(%arg0: i32, %arg1: i32, %arg2: memref<4xi32, #tpu.memory_space<smem>>, %arg3: memref<1x16x16xf32, #tpu.memory_space<vmem>>) attributes {dimension_semantics = [#tpu.dimension_semantics<parallel>, #tpu.dimension_semantics<parallel>], iteration_bounds = array<i64: 2, 1>, scalar_prefetch = 1 : i64, scratch_operands = 0 : i64, tpu.core_type = #tpu.core_type<tc>, window_params = [{transform_indices = @transform_0, window_bounds = array<i64: 1, 16, 16>}]} {
    %c1_i32 = arith.constant 1 : i32
    %0 = arith.muli %arg0, %c1_i32 : i32
    %c16_i32 = arith.constant 16 : i32
    %1 = arith.muli %arg1, %c16_i32 : i32
    %2 = tpu.iota {dimensions = array<i32: 0>} : vector<16x1xi32>
    %3 = vector.broadcast %1 : i32 to vector<16x1xi32>
    %4 = arith.addi %3, %2 : vector<16x1xi32>
    %5 = tpu.iota {dimensions = array<i32: 1>} : vector<1x16xi32>
    %c0_i32 = arith.constant 0 : i32
    %6 = arith.addi %0, %c0_i32 : i32
    %c1_i32_0 = arith.constant 1 : i32
    %7 = arith.minsi %6, %c1_i32_0 : i32
    %c2_i32 = arith.constant 2 : i32
    %8 = arith.muli %c2_i32, %7 : i32
    %9 = arith.index_cast %8 : i32 to index
    %10 = memref.load %arg2[%9] : memref<4xi32, #tpu.memory_space<smem>>
    %c2_i32_1 = arith.constant 2 : i32
    %11 = arith.muli %c2_i32_1, %7 : i32
    %c1_i32_2 = arith.constant 1 : i32
    %12 = arith.addi %11, %c1_i32_2 : i32
    %13 = arith.index_cast %12 : i32 to index
    %14 = memref.load %arg2[%13] : memref<4xi32, #tpu.memory_space<smem>>
    %15 = vector.broadcast %14 : i32 to vector<16x1xi32>
    %16 = arith.subi %4, %15 : vector<16x1xi32>
    %17 = vector.broadcast %10 : i32 to vector<1x16xi32>
    %18 = arith.subi %5, %17 : vector<1x16xi32>
    %19 = arith.sitofp %16 : vector<16x1xi32> to vector<16x1xf32>
    %20 = arith.sitofp %18 : vector<1x16xi32> to vector<1x16xf32>
    %21 = arith.mulf %19, %19 : vector<16x1xf32>
    %cst = arith.constant -2.000000e-02 : f32
    %22 = vector.broadcast %cst : f32 to vector<16x1xf32>
    %23 = arith.mulf %21, %22 : vector<16x1xf32>
    %24 = math.exp %23 : vector<16x1xf32>
    %25 = arith.mulf %20, %20 : vector<1x16xf32>
    %cst_3 = arith.constant -2.000000e-02 : f32
    %26 = vector.broadcast %cst_3 : f32 to vector<1x16xf32>
    %27 = arith.mulf %25, %26 : vector<1x16xf32>
    %28 = math.exp %27 : vector<1x16xf32>
    %29 = math.absi %16 : vector<16x1xi32>
    %c5_i32 = arith.constant 5 : i32
    %30 = vector.broadcast %c5_i32 : i32 to vector<16x1xi32>
    %31 = arith.cmpi sle, %29, %30 : vector<16x1xi32>
    %32 = arith.extui %31 : vector<16x1xi1> to vector<16x1xi32>
    %33 = arith.sitofp %32 : vector<16x1xi32> to vector<16x1xf32>
    %34 = math.absi %18 : vector<1x16xi32>
    %c5_i32_4 = arith.constant 5 : i32
    %35 = vector.broadcast %c5_i32_4 : i32 to vector<1x16xi32>
    %36 = arith.cmpi sle, %34, %35 : vector<1x16xi32>
    %37 = arith.extui %36 : vector<1x16xi1> to vector<1x16xi32>
    %38 = arith.sitofp %37 : vector<1x16xi32> to vector<1x16xf32>
    %cst_5 = arith.constant 1.58197665 : f32
    %39 = vector.broadcast %cst_5 : f32 to vector<16x1xf32>
    %40 = arith.mulf %33, %39 : vector<16x1xf32>
    %41 = arith.mulf %24, %40 : vector<16x1xf32>
    %cst_6 = arith.constant 0.581976712 : f32
    %42 = vector.broadcast %cst_6 : f32 to vector<16x1xf32>
    %43 = arith.mulf %33, %42 : vector<16x1xf32>
    %44 = arith.mulf %28, %38 : vector<1x16xf32>
    %45 = vector.broadcast %41 : vector<16x1xf32> to vector<16x16xf32>
    %46 = vector.broadcast %44 : vector<1x16xf32> to vector<16x16xf32>
    %47 = arith.mulf %45, %46 : vector<16x16xf32>
    %48 = vector.broadcast %43 : vector<16x1xf32> to vector<16x16xf32>
    %49 = vector.broadcast %38 : vector<1x16xf32> to vector<16x16xf32>
    %50 = arith.mulf %48, %49 : vector<16x16xf32>
    %51 = arith.subf %47, %50 : vector<16x16xf32>
    %52 = arith.index_cast %c0_i32 : i32 to index
    %c0 = arith.constant 0 : index
    %c0_7 = arith.constant 0 : index
    %53 = vector.load %arg3[%52, %c0, %c0_7] : memref<1x16x16xf32, #tpu.memory_space<vmem>>, vector<1x16x16xf32>
    %54 = vector.shape_cast %53 : vector<1x16x16xf32> to vector<16x16xf32>
    %55 = vector.shape_cast %51 : vector<16x16xf32> to vector<1x16x16xf32>
    tpu.vector_store %arg3[%52, %c0, %c0_7], %55 {strides = array<i32>} : memref<1x16x16xf32, #tpu.memory_space<vmem>>, vector<1x16x16xf32>,
    %c1_i32_8 = arith.constant 1 : i32
    return
  }
  func.func @transform_0(%arg0: i32, %arg1: i32, %arg2: memref<4xi32, #tpu.memory_space<smem>>) -> (i32, i32, i32) {
    %c0_i32 = arith.constant 0 : i32
    %c0_i32_0 = arith.constant 0 : i32
    return %arg0, %arg1, %c0_i32 : i32, i32, i32
  }
}

</mosaic_0001>

<llo_original>
// kernel: tpu_custom_call.1
$region0: #{tpu_custom_call.1}
  #allocation0 [shape = 'u32[]', space=smem, size = 0x4, offset = 0x4, fixed_abs, tag = 'smem constant byte address 0x4 - core index']
  #allocation1 [shape = 'u32[144,128]{1,0:T(1,128)}', space=vmem, size = 0x12000, scoped, tag = 'internal scratch']
  #allocation2 [shape = 's32[1]{0}', space=sflag, size = 0x4, scoped, tag = 'scoped memory for tpu_custom_call.1']
  #allocation3 [shape = 'u8[512]{0}', space=smem, size = 0x200, scoped, tag = 'prefetched SMEM operand 0']
  %s0 = inlined_call_operand.hbm [shape: s32[4], index: 0, kind: input, shape index: {}]
  %s1 = inlined_call_operand.hbm [shape: f32[2,16,16], index: 1, kind: output, shape index: {}]
  %s2 = sld [smem:[#allocation0]]
  $region25: #{tpu_custom_call.1} parent=0
    _
  %s4 = ssub.s32 1, %s2
  %s5 = scalar_select 0, %s4, %s2
  %7 = dma.hbm_to_smem %s0, 16, [#allocation3], [#allocation2]
  %8 = dma.done [#allocation2], 16
  %9 = sfence
  $region1: #{tpu_custom_call.1} parent=0
    #allocation4 [shape = 'u8[16384]{0}', space=vmem, size = 0x4000, scoped, tag = 'output window, operand 0']
    #allocation5 [shape = 's32[2]{0}', space=sflag, size = 0x8, scoped, tag = 'scoped memory for tpu_custom_call.1']
    %10 = vsyncpa [#allocation5], 0
    %s11 = scalar_lea.sflag [#allocation5], 1
    %12 = vsyncpa %s11, 0
    loop: start=0, step=1, limit=3
    $region2: #{tpu_custom_call.1} parent=1 // loop_pre_header
      _
    $region3: #{tpu_custom_call.1} parent=1 // loop_header
      %s14 = sphi 0, %s18
      %p15 = scmp.ge.s32.totalorder %s14, 3
      %s20 = sphi 0, %s30
      %s21 = sphi 0, %s26
      %s22 = sphi 0, %s20
      %s23 = sphi 0, %s21
      %s35 = sphi 0, %s37
      %s38 = sphi 0, %s35
      %s48 = sphi 0, %s38
    $region4: #{tpu_custom_call.1} parent=1 // loop_header_branch
      %17 = sbr.rel (%p15) target = $region8
    $region5: #{tpu_custom_call.1} parent=1 // loop_body
      %s19 = ssub.s32 %s14, 1
      %s24 = sadd.s32 1, %s21
      %p25 = scmp.ge.s32.totalorder %s24, 1
      %s26 = scalar_select %p25, 0, %s24
      %s27 = sadd.s32 1, %s20
      %s28 = scalar_select %p25, %s27, %s20
      %p29 = scmp.ge.s32.totalorder %s28, 2
      %s30 = scalar_select %p29, 0, %s28
      %s31 = ssub.s32 %s20, %s30
      %s32 = ssub.s32 %s21, %s26
      %s33 = sor.u32 %s31, %s32
      %p34 = scmp.eq.s32.totalorder %s33, 0
      %s36 = sadd.s32 %s35, 1
      %s37 = scalar_select %p34, %s35, %s36
      %p39 = pneg %p34
      %p40 = scmp.eq.s32.totalorder %s14, 1
      %p41 = por %p39, %p40
      %p42 = scmp.ne.s32.totalorder %s35, %s38
      %p43 = scmp.eq.s32.totalorder %s14, 0
      %p44 = por %p42, %p43
      %p45 = scmp.ne.s32.totalorder %s35, %s38
      %p46 = scmp.eq.s32.totalorder %s19, 1
      %p47 = por %p45, %p46
      %p49 = scmp.ne.s32.totalorder %s38, %s48
      %p50 = scmp.eq.s32.totalorder %s19, 0
      %p51 = por %p49, %p50
      %p52 = scmp.lt.s32.totalorder %s14, 2
      // Predicated region
      $region9: #{tpu_custom_call.1} parent=5 // pred_check
        %p53 = pneg %p52
      $region10: #{tpu_custom_call.1} parent=5 // pred_check_branch
        %55 = sbr.rel (%p53) target = $region12
      $region11: #{tpu_custom_call.1} parent=5 // pred_region
        %p56 = pneg %p44
        %p57 = pneg %p41
        %s58 = sand.u32 %s35, 1
        %s59 = scalar_lea.sflag [#allocation5], %s58
        %s60 = sand.u32 %s35, 1
        %s61 = smul.addr %s60, 16
        %s62 = scalar_lea.vmem [#allocation4], %s61
        %s63 = smul.u32 2, %s21
        %s64 = smul.u32 %s21, 16
        %v65 = vlaneseq
        %v66 = vshrl.u32 %v65, 7
        %v67 = vadd.s32 %v66, 8
        %v68 = vstv %s64
        %v69 = vadd.s32 %v68, %v66
        %v70 = vadd.s32 %v68, %v67
        %v71 = vlaneseq
        %v72 = vand.u32 %v71, 127
        %p73 = scmp.lt.s32.totalorder %s20, 1
        %s74 = scalar_select %p73, %s20, 1
        %s75 = smul.u32 %s74, 2
        %s76 = sld [smem:[#allocation3 + %s75]]
        %s77 = sadd.s32 %s75, 1
        %s78 = sld [smem:[#allocation3 + %s77]]
        %v79 = vstv %s78
        %v80 = vsub.s32 %v69, %v79
        %v81 = vsub.s32 %v70, %v79
        %v82 = vstv %s76
        %v83 = vsub.s32 %v72, %v82
        %v84 = vcvt.s32.f32 %v80
        %v85 = vcvt.s32.f32 %v81
        %v86 = vcvt.s32.f32 %v83
        %v87 = vmul.f32 %v84, %v84
        %v88 = vmul.f32 %v85, %v85
        %v89 = vmul.f32 %v87, -0.02
        %v90 = vmul.f32 %v88, -0.02
        %v91 = vmul.f32 %v89, 1.442695
        %v92 = vpow.pop %v91
        %v93 = vmul.f32 %v90, 1.442695
        %v94 = vpow.pop %v93
        %v95 = vmul.f32 %v86, %v86
        %v96 = vmul.f32 %v95, -0.02
        %v97 = vmul.f32 %v96, 1.442695
        %v98 = vpow.pop %v97
        %vm99 = vcmp.lt.s32.totalorder %v80, 0
        %v100 = vsub.s32 0, %v80
        %v101 = vsel %vm99, %v100, %v80
        %vm102 = vcmp.lt.s32.totalorder %v81, 0
        %v103 = vsub.s32 0, %v81
        %v104 = vsel %vm102, %v103, %v81
        %vm105 = vcmp.le.s32.totalorder %v101, 5
        %vm106 = vcmp.le.s32.totalorder %v104, 5
        %v107 = vsel %vm105, 1, 0
        %v108 = vsel %vm106, 1, 0
        %v109 = vcvt.s32.f32 %v107
        %v110 = vcvt.s32.f32 %v108
        %vm111 = vcmp.lt.s32.totalorder %v83, 0
        %v112 = vsub.s32 0, %v83
        %v113 = vsel %vm111, %v112, %v83
        %vm114 = vcmp.le.s32.totalorder %v113, 5
        %v115 = vsel %vm114, 1, 0
        %v116 = vcvt.s32.f32 %v115
        %v117 = vmul.f32 %v109, 1.5819767
        %v118 = vmul.f32 %v110, 1.5819767
        %v119 = vmul.f32 %v92, %v117
        %v120 = vmul.f32 %v94, %v118
        %v121 = vmul.f32 %v109, 0.5819767
        %v122 = vmul.f32 %v110, 0.5819767
        %v123 = vmul.f32 %v98, %v116
        %v124 = vmul.f32 %v119, %v123
        %v125 = vmul.f32 %v120, %v123
        %v126 = vmul.f32 %v121, %v116
        %v127 = vmul.f32 %v122, %v116
        %v128 = vsub.f32 %v124, %v126
        %v129 = vsub.f32 %v125, %v127
        %vm130 = vcmask 130048
        %131 = vst.msk [vmem:[%s62] sm:$0xff] %vm130, %v128
        %132 = vst.msk [vmem:[%s62 + $0x8] sm:$0xff] %vm130, %v129
        %s133 = sand.u32 %s35, 1
        %s134 = scalar_lea.sflag [#allocation5], %s133
        %s135 = sand.u32 %s35, 1
        %s136 = smul.addr %s135, 16
        %s137 = scalar_lea.vmem [#allocation4], %s136
        // Predicated region
        $region13: #{tpu_custom_call.1} parent=11 // pred_check
          %p138 = pneg %p41
        $region14: #{tpu_custom_call.1} parent=11 // pred_check_branch
          %140 = sbr.rel (%p138) target = $region16
        $region15: #{tpu_custom_call.1} parent=11 // pred_region
          %s141 = smul.u32 2, %s21
          %s143 = ssub.s32 256, 256
          %144 = vsyncadd %s134, %s143
          %s145 = smul.addr %s20, 2
          %s146 = sadd.s32 %s141, %s145
          %s147 = smul.addr %s146, 128
          %s148 = scalar_lea.hbm %s1, %s147
          %s149 = sshll.u32 %s137, 4
          %s150 = int_to_ptr.vmem [resolvable:$true] %s149
          %155 = dma.vmem_to_hbm [thread:$0]  %s150, 256, %s148, %s134, 128, 128, 8
        $region16: #{tpu_custom_call.1} parent=11 // pred_fallthru
          _
      $region12: #{tpu_custom_call.1} parent=5 // pred_fallthru
        _
      %p156 = scmp.le.s32.totalorder 1, %s14
      // Predicated region
      $region17: #{tpu_custom_call.1} parent=5 // pred_check
        %p157 = pneg %p156
      $region18: #{tpu_custom_call.1} parent=5 // pred_check_branch
        %159 = sbr.rel (%p157) target = $region20
      $region19: #{tpu_custom_call.1} parent=5 // pred_region
        %s160 = ssub.s32 %s14, 1
        // Predicated region
        $region21: #{tpu_custom_call.1} parent=19 // pred_check
          %p161 = pneg %p47
        $region22: #{tpu_custom_call.1} parent=19 // pred_check_branch
          %163 = sbr.rel (%p161) target = $region24
        $region23: #{tpu_custom_call.1} parent=19 // pred_region
          %s164 = sand.u32 %s38, 1
          %s165 = scalar_lea.sflag [#allocation5], %s164
          %s166 = sand.u32 %s38, 1
          %s167 = smul.addr %s166, 16
          %s168 = scalar_lea.vmem [#allocation4], %s167
          %169 = dma.done %s165, 256
        $region24: #{tpu_custom_call.1} parent=19 // pred_fallthru
          _
      $region20: #{tpu_custom_call.1} parent=5 // pred_fallthru
        _
    $region6: #{tpu_custom_call.1} parent=1 // loop_footer
      %s18 = sadd.s32 1, %s14
    $region7: #{tpu_custom_call.1} parent=1 // loop_footer_branch
      %13 = sbr.rel target = $region3
    $region8: #{tpu_custom_call.1} parent=1 // loop_exit
      _
    %170 = vsyncpa [#allocation5], 1
    %s171 = scalar_lea.sflag [#allocation5], 1
    %172 = vsyncpa %s171, 1

</llo_original>
